<compile_context>
chip_gen: v7x
topology: tpu7x:2x2x1
jax: 0.10.0
libtpu: 0.0.40
codegen_flags: <defaults>
</compile_context>

<pallas_src>
import functools

import jax
import jax.numpy as jnp
from jax.experimental import pallas as pl
from jax.experimental.pallas import tpu as pltpu

_LANE = 128


def _round_up(x, m):
    return (x + m - 1) // m * m


def _sigmoid(x):
    # Exact sigmoid (EUP exp + divide).  pl.reciprocal(1+exp(-x), approx=True)
    # is a free-slot option when ~1e-3 relative error is acceptable.
    return 1.0 / (1.0 + jnp.exp(-x))


def _vmem_limit_bytes():
    """Scoped-VMEM limit: ~75% of physical, capped at 96 MiB.

    v7x (64 MiB physical) -> 48 MiB; v5e/v6e (128 MiB) -> 96 MiB.  Falls back
    to the conservative 48 MiB if the hardware query is unavailable."""
    cap = 64 * 1024 * 1024
    try:
        cap = int(pltpu.get_tpu_info().vmem_capacity_bytes)
    except Exception:
        pass
    return min(cap * 3 // 4, 96 * 1024 * 1024)


# ---------------------------------------------------------------------------
# Fused single-pass kernels (whole image resident in VMEM).
# ---------------------------------------------------------------------------

def _gam_fused_folded_kernel(xf_ref, w1cf_ref, b1c_ref, w2ct_ref, b2ct_ref,
                             w1f_ref, b1f_ref, w2e_ref, b2st_ref, o_ref):
    """Lane-dense fused GAM for C < 128.

    xf is (1, R, 128) with R = HW*C/128; every lane row holds S = 128/C
    consecutive spatial positions.  Folded weights (see wrapper) turn the 1x1
    convs into block-diagonal matmuls on the dense layout."""
    x = xf_ref[0].astype(jnp.float32)                             # (R, 128)
    # Global average pool: one cross-sublane reduce per image; per-channel fold
    # and the 1/HW scale are baked into w1cf.
    vec = jnp.sum(x, axis=0, keepdims=True)                       # (1, 128)
    h1 = jnp.maximum(
        jnp.dot(vec, w1cf_ref[...], preferred_element_type=jnp.float32)
        + b1c_ref[...], 0.0)                                      # (1, Cr)
    ca = _sigmoid(
        jnp.dot(h1, w2ct_ref[...], preferred_element_type=jnp.float32)
        + b2ct_ref[...])                                          # (1, 128), pre-tiled
    x1 = x * ca
    h2 = jnp.maximum(
        jnp.dot(x1, w1f_ref[...], preferred_element_type=jnp.float32)
        + b1f_ref[...], 0.0)                                      # (R, S*Cr)
    sa = _sigmoid(
        jnp.dot(h2, w2e_ref[...], preferred_element_type=jnp.float32)
        + b2st_ref[...])                                          # (R, 128), per-position broadcast
    o_ref[0] = (x1 * sa).astype(o_ref.dtype)


def _gam_fused_kernel(x_ref, w1c_ref, b1c_ref, w2c_ref, b2c_ref,
                      w1s_ref, b1s_ref, w2s_row_ref, b2s_ref, o_ref, *, inv_hw):
    """Fused GAM on the natural (HW, C) layout (used when C >= 128 or folding
    preconditions fail)."""
    x = x_ref[0].astype(jnp.float32)                              # (HW, C)
    pooled = jnp.sum(x, axis=0, keepdims=True) * inv_hw           # (1, C)
    h1 = jnp.maximum(
        jnp.dot(pooled, w1c_ref[...], preferred_element_type=jnp.float32)
        + b1c_ref[...], 0.0)
    ca = _sigmoid(
        jnp.dot(h1, w2c_ref[...], preferred_element_type=jnp.float32)
        + b2c_ref[...])                                           # (1, C)
    x1 = x * ca
    h2 = jnp.maximum(
        jnp.dot(x1, w1s_ref[...], preferred_element_type=jnp.float32)
        + b1s_ref[...], 0.0)                                      # (HW, Cr)
    # Cr -> 1 projection as a VPU/XLU reduction (avoids a degenerate N=1 matmul).
    sa = _sigmoid(jnp.sum(h2 * w2s_row_ref[...], axis=-1, keepdims=True)
                  + b2s_ref[...])                                 # (HW, 1)
    o_ref[0] = (x1 * sa).astype(o_ref.dtype)


# ---------------------------------------------------------------------------
# Two-pass streaming fallback (image does not fit in VMEM).
# ---------------------------------------------------------------------------

def _gam_channel_attn_kernel(x_ref, w1c_ref, b1c_ref, w2c_ref, b2c_ref,
                             ca_ref, acc_ref, *, inv_hw):
    """Accumulate the spatial sum over HW tiles; finalize with the channel MLP."""
    t = pl.program_id(1)

    @pl.when(t == 0)
    def _():
        acc_ref[...] = jnp.zeros_like(acc_ref)

    x = x_ref[0].astype(jnp.float32)                              # (THW, C)
    acc_ref[...] += jnp.sum(x, axis=0, keepdims=True)             # (1, C)

    @pl.when(t == pl.num_programs(1) - 1)
    def _():
        pooled = acc_ref[...] * inv_hw
        h1 = jnp.maximum(
            jnp.dot(pooled, w1c_ref[...], preferred_element_type=jnp.float32)
            + b1c_ref[...], 0.0)
        ca_ref[0] = _sigmoid(
            jnp.dot(h1, w2c_ref[...], preferred_element_type=jnp.float32)
            + b2c_ref[...])


def _gam_spatial_kernel(x_ref, ca_ref, w1s_ref, b1s_ref, w2s_row_ref, b2s_ref,
                        o_ref):
    """Per (batch, HW tile): apply channel attention, then spatial attention."""
    x = x_ref[0].astype(jnp.float32)                              # (THW, C)
    x1 = x * ca_ref[0]
    h2 = jnp.maximum(
        jnp.dot(x1, w1s_ref[...], preferred_element_type=jnp.float32)
        + b1s_ref[...], 0.0)
    sa = _sigmoid(jnp.sum(h2 * w2s_row_ref[...], axis=-1, keepdims=True)
                  + b2s_ref[...])
    o_ref[0] = (x1 * sa).astype(o_ref.dtype)


# ---------------------------------------------------------------------------
# VMEM footprint accounting (input + output blocks + lane-padded intermediates).
# ---------------------------------------------------------------------------

def _apply_block_bytes(rows, c, cr, in_item, out_item):
    c_pad = _round_up(max(c, 1), _LANE)
    cr_pad = _round_up(max(cr, 1), _LANE)
    b = 2 * rows * c * in_item           # input block, double-buffered
    b += 2 * rows * c * out_item         # output block, double-buffered
    b += rows * c_pad * 4                # x upcast to f32 (lane-padded)
    b += rows * c_pad * 4                # x1
    b += rows * cr_pad * 4               # h2
    b += rows * _LANE * 4                # sa / logits
    return b


def _folded_block_bytes(hw, c, in_item, out_item):
    r = hw * c // _LANE
    b = 2 * r * _LANE * in_item + 2 * r * _LANE * out_item
    b += 4 * r * _LANE * 4               # x_f32, x1, h2, sa — all lane-dense
    return b


def _pick_hw_tile(hw, c, cr, in_item, out_item, budget):
    """Largest multiple-of-8 divisor of hw whose full block footprint fits."""
    best = 8
    d = 8
    while d <= hw:
        if hw % d == 0 and _apply_block_bytes(d, c, cr, in_item, out_item) <= budget:
            best = d
        d += 8
    return best


# ---------------------------------------------------------------------------
# Wrappers.
# ---------------------------------------------------------------------------

def _fused_folded_call(x, params, B, HW, C, Cr, out_dtype, cparams):
    """Fused lane-dense path.  Folded weights are tiny and could be cached once
    per module instead of recomputed per call."""
    S = _LANE // C
    R = HW * C // _LANE
    f32 = jnp.float32
    xf = x.reshape(B, R, _LANE)

    eye_c = jnp.eye(C, dtype=f32)
    eye_s = jnp.eye(S, dtype=f32)
    w1c = params["w1c"].astype(f32)
    b1c = params["b1c"].astype(f32)
    # Pooling fold + 1/HW absorbed into the first channel-MLP weight:
    #   w1c_f[s*C+c, k] = w1c[c, k] / HW
    w1c_f = (jnp.tile(eye_c, (S, 1)) @ w1c) / HW                   # (128, Cr)
    # Per-position tiling of ca absorbed into the second channel-MLP weight/bias.
    tile_c = jnp.tile(eye_c, (1, S))                               # (C, 128)
    w2c_t = params["w2c"].astype(f32) @ tile_c                     # (Cr, 128)
    b2c_t = params["b2c"].astype(f32) @ tile_c                     # (1, 128)
    # Block-diagonal (per spatial position) spatial MLP:
    #   w1f[s*C+c, s*Cr+k] = w1s[c, k]
    w1f = jnp.einsum("st,ck->sctk", eye_s,
                     params["w1s"].astype(f32)).reshape(S * C, S * Cr)
    b1f = jnp.tile(params["b1s"].astype(f32), (1, S))              # (1, S*Cr)
    #   w2e[s*Cr+k, s*C+c] = w2s[k]  (second conv fused with the sa broadcast)
    w2e = jnp.einsum("st,kc->sktc", eye_s,
                     jnp.tile(params["w2s"].astype(f32), (1, C))
                     ).reshape(S * Cr, S * C)                      # (S*Cr, 128)
    b2s_t = jnp.tile(params["b2s"].astype(f32), (1, _LANE))        # (1, 128)

    xf_spec = pl.BlockSpec((1, R, _LANE), lambda b: (b, 0, 0))

    def cspec(a):
        return pl.BlockSpec(a.shape, lambda b: (0,) * a.ndim)

    out = pl.pallas_call(
        _gam_fused_folded_kernel,
        out_shape=jax.ShapeDtypeStruct((B, R, _LANE), out_dtype),
        grid_spec=pltpu.PrefetchScalarGridSpec(
            num_scalar_prefetch=0,
            grid=(B,),
            in_specs=[xf_spec, cspec(w1c_f), cspec(b1c), cspec(w2c_t),
                      cspec(b2c_t), cspec(w1f), cspec(b1f), cspec(w2e),
                      cspec(b2s_t)],
            out_specs=xf_spec,
        ),
        compiler_params=cparams,
    )(xf, w1c_f, b1c, w2c_t, b2c_t, w1f, b1f, w2e, b2s_t)
    return out.reshape(B, HW, C)


def _fused_call(x, params, B, HW, C, out_dtype, cparams):
    f32 = jnp.float32
    w1c, b1c = params["w1c"].astype(f32), params["b1c"].astype(f32)
    w2c, b2c = params["w2c"].astype(f32), params["b2c"].astype(f32)
    w1s, b1s = params["w1s"].astype(f32), params["b1s"].astype(f32)
    w2s_row = params["w2s"].astype(f32).reshape(1, -1)
    b2s = params["b2s"].astype(f32).reshape(1, 1)

    x_spec = pl.BlockSpec((1, HW, C), lambda b: (b, 0, 0))

    def cspec(a):
        return pl.BlockSpec(a.shape, lambda b: (0,) * a.ndim)

    return pl.pallas_call(
        functools.partial(_gam_fused_kernel, inv_hw=1.0 / HW),
        out_shape=jax.ShapeDtypeStruct((B, HW, C), out_dtype),
        grid_spec=pltpu.PrefetchScalarGridSpec(
            num_scalar_prefetch=0,
            grid=(B,),
            in_specs=[x_spec, cspec(w1c), cspec(b1c), cspec(w2c), cspec(b2c),
                      cspec(w1s), cspec(b1s), cspec(w2s_row), cspec(b2s)],
            out_specs=x_spec,
        ),
        compiler_params=cparams,
    )(x, w1c, b1c, w2c, b2c, w1s, b1s, w2s_row, b2s)


def gam_forward_nhwc(x_bhwc, params, *, allow_fold=True, force_two_pass=False,
                     out_dtype=None, _test_budget_bytes=None):
    """GAM forward on NHWC input (B, H, W, C). Returns NHWC in `out_dtype`
    (default: input dtype — pass bf16 in/out to halve HBM traffic; compute is
    always f32 in-kernel)."""
    B, H, W, C = x_bhwc.shape
    HW = H * W
    Cr = params["w1c"].shape[1]
    out_dtype = x_bhwc.dtype if out_dtype is None else jnp.dtype(out_dtype)
    in_item = x_bhwc.dtype.itemsize
    out_item = jnp.dtype(out_dtype).itemsize

    vmem_limit = _vmem_limit_bytes()
    budget = (int(0.85 * vmem_limit) if _test_budget_bytes is None
              else int(_test_budget_bytes))

    x = x_bhwc.reshape(B, HW, C)

    # ---------------- fused single-pass path ----------------
    can_fold = (allow_fold and C < _LANE and _LANE % C == 0
                and (HW * C) % _LANE == 0 and Cr >= 1)
    if not force_two_pass:
        folded = can_fold
        footprint = (_folded_block_bytes(HW, C, in_item, out_item) if folded
                     else _apply_block_bytes(HW, C, Cr, in_item, out_item))
        if footprint <= budget:
            cparams = pltpu.CompilerParams(
                dimension_semantics=("parallel",),
                vmem_limit_bytes=vmem_limit)
            if folded:
                out = _fused_folded_call(x, params, B, HW, C, Cr, out_dtype,
                                         cparams)
            else:
                out = _fused_call(x, params, B, HW, C, out_dtype, cparams)
            return out.reshape(B, H, W, C)

    # ---------------- two-pass streaming fallback ----------------
    # Pad HW to a multiple of 8 if needed: zero rows do not bias the pooled
    # mean (the 1/HW scale uses the true HW) and padded rows are sliced off.
    hw_pad = _round_up(HW, 8)
    if hw_pad != HW:
        x = jnp.pad(x, ((0, 0), (0, hw_pad - HW), (0, 0)))

    THW = _pick_hw_tile(hw_pad, C, Cr, in_item, out_item, budget)
    n_hw = hw_pad // THW

    f32 = jnp.float32
    w1c, b1c = params["w1c"].astype(f32), params["b1c"].astype(f32)
    w2c, b2c = params["w2c"].astype(f32), params["b2c"].astype(f32)
    w1s, b1s = params["w1s"].astype(f32), params["b1s"].astype(f32)
    w2s_row = params["w2s"].astype(f32).reshape(1, -1)
    b2s = params["b2s"].astype(f32).reshape(1, 1)

    def cspec(a):
        return pl.BlockSpec(a.shape, lambda b, t: (0,) * a.ndim)

    x_spec = pl.BlockSpec((1, THW, C), lambda b, t: (b, t, 0))
    ca_spec = pl.BlockSpec((1, 1, C), lambda b, t: (b, 0, 0))

    cparams_reduce = pltpu.CompilerParams(
        dimension_semantics=("parallel", "arbitrary"),
        vmem_limit_bytes=vmem_limit)
    cparams_par = pltpu.CompilerParams(
        dimension_semantics=("parallel", "parallel"),
        vmem_limit_bytes=vmem_limit)

    # Pass 1: channel attention -> ca (B, 1, C) in f32.  The HW axis must stay
    # the innermost sequential ("arbitrary") axis for the accumulator ordering.
    ca = pl.pallas_call(
        functools.partial(_gam_channel_attn_kernel, inv_hw=1.0 / HW),
        out_shape=jax.ShapeDtypeStruct((B, 1, C), f32),
        grid_spec=pltpu.PrefetchScalarGridSpec(
            num_scalar_prefetch=0,
            grid=(B, n_hw),
            in_specs=[x_spec, cspec(w1c), cspec(b1c), cspec(w2c), cspec(b2c)],
            out_specs=ca_spec,
            scratch_shapes=[pltpu.VMEM((1, C), f32)],
        ),
        compiler_params=cparams_reduce,
    )(x, w1c, b1c, w2c, b2c)

    # Pass 2: apply ca, spatial attention, write output.
    out = pl.pallas_call(
        _gam_spatial_kernel,
        out_shape=jax.ShapeDtypeStruct((B, hw_pad, C), out_dtype),
        grid_spec=pltpu.PrefetchScalarGridSpec(
            num_scalar_prefetch=0,
            grid=(B, n_hw),
            in_specs=[x_spec, ca_spec, cspec(w1s), cspec(b1s),
                      cspec(w2s_row), cspec(b2s)],
            out_specs=x_spec,
        ),
        compiler_params=cparams_par,
    )(x, ca, w1s, b1s, w2s_row, b2s)

    if hw_pad != HW:
        out = out[:, :HW]
    return out.reshape(B, H, W, C)


def gam_forward(x_nchw, params, **kwargs):
    """NCHW interface matching the PyTorch module.  The two full-tensor
    transposes roughly double end-to-end cost of this HBM-bound op — prefer
    gam_forward_nhwc in a channels-last model."""
    B, C, H, W = x_nchw.shape
    x_bhwc = jnp.transpose(x_nchw, (0, 2, 3, 1))
    y = gam_forward_nhwc(x_bhwc, params, **kwargs)
    return jnp.transpose(y, (0, 3, 1, 2))


def init_gam_params(key, in_channels, reduction_ratio=8):
    """Deterministic synthetic init matching the shapes of GAM.__init__.
    (A Conv2d(Cin, Cout, 1) weight (Cout, Cin, 1, 1) maps to our (Cin, Cout)
    matrix via weight[:, :, 0, 0].T.)"""
    cr = in_channels // reduction_ratio
    ks = jax.random.split(key, 8)
    scale = 0.1
    return {
        "w1c": scale * jax.random.normal(ks[0], (in_channels, cr), jnp.float32),
        "b1c": scale * jax.random.normal(ks[1], (1, cr), jnp.float32),
        "w2c": scale * jax.random.normal(ks[2], (cr, in_channels), jnp.float32),
        "b2c": scale * jax.random.normal(ks[3], (1, in_channels), jnp.float32),
        "w1s": scale * jax.random.normal(ks[4], (in_channels, cr), jnp.float32),
        "b1s": scale * jax.random.normal(ks[5], (1, cr), jnp.float32),
        "w2s": scale * jax.random.normal(ks[6], (cr, 1), jnp.float32),
        "b2s": scale * jax.random.normal(ks[7], (1, 1), jnp.float32),
    }


def gam_reference(x_nchw, params):
    """Pure-JAX reference with identical semantics (f32)."""
    B, C, H, W = x_nchw.shape
    x = jnp.transpose(x_nchw, (0, 2, 3, 1)).reshape(B, H * W, C)
    x = x.astype(jnp.float32)
    pooled = jnp.mean(x, axis=1, keepdims=True)                    # (B,1,C)
    h1 = jax.nn.relu(pooled @ params["w1c"] + params["b1c"])
    ca = jax.nn.sigmoid(h1 @ params["w2c"] + params["b2c"])        # (B,1,C)
    x1 = x * ca
    h2 = jax.nn.relu(x1 @ params["w1s"] + params["b1s"])
    sa = jax.nn.sigmoid(h2 @ params["w2s"] + params["b2s"])        # (B,HW,1)
    y = x1 * sa
    return jnp.transpose(y.reshape(B, H, W, C), (0, 3, 1, 2))


if __name__ == "__main__":
    key = jax.random.PRNGKey(0)
    k_x, k_p = jax.random.split(key)

    B, C, H, W = 2, 16, 16, 16        # in_channels=16, reduction_ratio=8 -> Cr=2
    x = jax.random.normal(k_x, (B, C, H, W), jnp.float32)
    params = init_gam_params(k_p, in_channels=C, reduction_ratio=8)
    y_ref = gam_reference(x, params)

    # 1) default: fused, lane-dense folded path (C < 128).
    y = jax.block_until_ready(gam_forward(x, params))
    assert y.shape == x.shape and y.dtype == x.dtype
    assert jnp.allclose(y, y_ref, atol=1e-4, rtol=1e-4), "folded fused mismatch"

    # 2) fused, natural-layout path.
    y2 = jax.block_until_ready(gam_forward(x, params, allow_fold=False))
    assert jnp.allclose(y2, y_ref, atol=1e-4, rtol=1e-4), "fused mismatch"

    # 3) two-pass streaming fallback with a tiny test budget (forces 4 HW tiles
    #    per batch element, exercising the accumulator init/finalize path).
    y3 = jax.block_until_ready(
        gam_forward(x, params, force_two_pass=True,
                    _test_budget_bytes=200 * 1024))
    assert jnp.allclose(y3, y_ref, atol=1e-4, rtol=1e-4), "two-pass mismatch"

    # 4) bf16 at the HBM boundary (halves HBM traffic; compute stays f32).
    x_bf16 = x.astype(jnp.bfloat16)
    y4 = jax.block_until_ready(gam_forward(x_bf16, params))
    assert y4.dtype == jnp.bfloat16
    y_ref_bf16 = gam_reference(x_bf16.astype(jnp.float32), params)
    assert jnp.allclose(y4.astype(jnp.float32), y_ref_bf16,
                        atol=2e-2, rtol=2e-2), "bf16 mismatch"

    print("KERNEL_OK")
</pallas_src>

<mosaic_0001>
module attributes {stable_mosaic.version = 11 : i64} {
  func.func @_gam_fused_folded_kernel(%arg0: i32, %arg1: memref<1x32x128xf32, #tpu.memory_space<vmem>>, %arg2: memref<128x2xf32, #tpu.memory_space<vmem>>, %arg3: memref<1x2xf32, #tpu.memory_space<vmem>>, %arg4: memref<2x128xf32, #tpu.memory_space<vmem>>, %arg5: memref<1x128xf32, #tpu.memory_space<vmem>>, %arg6: memref<128x16xf32, #tpu.memory_space<vmem>>, %arg7: memref<1x16xf32, #tpu.memory_space<vmem>>, %arg8: memref<16x128xf32, #tpu.memory_space<vmem>>, %arg9: memref<1x128xf32, #tpu.memory_space<vmem>>, %arg10: memref<1x32x128xf32, #tpu.memory_space<vmem>>) attributes {dimension_semantics = [#tpu.dimension_semantics<parallel>], iteration_bounds = array<i64: 2>, scalar_prefetch = 0 : i64, scratch_operands = 0 : i64, tpu.core_type = #tpu.core_type<tc>, window_params = [{transform_indices = @transform_0, window_bounds = array<i64: 1, 32, 128>}, {pipeline_mode = #tpu.pipeline_mode<synchronous>, transform_indices = @transform_1, window_bounds = array<i64: 128, 2>}, {pipeline_mode = #tpu.pipeline_mode<synchronous>, transform_indices = @transform_2, window_bounds = array<i64: 1, 2>}, {pipeline_mode = #tpu.pipeline_mode<synchronous>, transform_indices = @transform_3, window_bounds = array<i64: 2, 128>}, {pipeline_mode = #tpu.pipeline_mode<synchronous>, transform_indices = @transform_4, window_bounds = array<i64: 1, 128>}, {pipeline_mode = #tpu.pipeline_mode<synchronous>, transform_indices = @transform_5, window_bounds = array<i64: 128, 16>}, {pipeline_mode = #tpu.pipeline_mode<synchronous>, transform_indices = @transform_6, window_bounds = array<i64: 1, 16>}, {pipeline_mode = #tpu.pipeline_mode<synchronous>, transform_indices = @transform_7, window_bounds = array<i64: 16, 128>}, {pipeline_mode = #tpu.pipeline_mode<synchronous>, transform_indices = @transform_8, window_bounds = array<i64: 1, 128>}, {transform_indices = @transform_9, window_bounds = array<i64: 1, 32, 128>}]} {
    %c0 = arith.constant 0 : index
    %c0_0 = arith.constant 0 : index
    %c0_1 = arith.constant 0 : index
    %0 = vector.load %arg1[%c0, %c0_0, %c0_1] : memref<1x32x128xf32, #tpu.memory_space<vmem>>, vector<1x32x128xf32>
    %1 = vector.shape_cast %0 : vector<1x32x128xf32> to vector<32x128xf32>
    %cst = arith.constant dense<0.000000e+00> : vector<128xf32>
    %2 = vector.multi_reduction <add>, %1, %cst [0] : vector<32x128xf32> to vector<128xf32>
    %3 = vector.shape_cast %2 : vector<128xf32> to vector<1x128xf32>
    %c0_2 = arith.constant 0 : index
    %c0_3 = arith.constant 0 : index
    %4 = vector.load %arg2[%c0_2, %c0_3] : memref<128x2xf32, #tpu.memory_space<vmem>>, vector<128x2xf32>
    %cst_4 = arith.constant dense<0.000000e+00> : vector<1x2xf32>
    %5 = tpu.matmul %3, %4, %cst_4 {dimension_numbers = #tpu.dot_dimension_numbers<[1], [0], [0], [1], [0, 0, 1, 1], [], []>} : vector<1x128xf32>, vector<128x2xf32>, vector<1x2xf32> -> vector<1x2xf32>
    %c0_5 = arith.constant 0 : index
    %c0_6 = arith.constant 0 : index
    %6 = vector.load %arg3[%c0_5, %c0_6] : memref<1x2xf32, #tpu.memory_space<vmem>>, vector<1x2xf32>
    %7 = arith.addf %5, %6 : vector<1x2xf32>
    %cst_7 = arith.constant 0.000000e+00 : f32
    %8 = vector.broadcast %cst_7 : f32 to vector<1x2xf32>
    %9 = arith.maximumf %7, %8 : vector<1x2xf32>
    %c0_8 = arith.constant 0 : index
    %c0_9 = arith.constant 0 : index
    %10 = vector.load %arg4[%c0_8, %c0_9] : memref<2x128xf32, #tpu.memory_space<vmem>>, vector<2x128xf32>
    %cst_10 = arith.constant dense<0.000000e+00> : vector<1x128xf32>
    %11 = tpu.matmul %9, %10, %cst_10 {dimension_numbers = #tpu.dot_dimension_numbers<[1], [0], [0], [1], [0, 0, 1, 1], [], []>} : vector<1x2xf32>, vector<2x128xf32>, vector<1x128xf32> -> vector<1x128xf32>
    %c0_11 = arith.constant 0 : index
    %c0_12 = arith.constant 0 : index
    %12 = vector.load %arg5[%c0_11, %c0_12] : memref<1x128xf32, #tpu.memory_space<vmem>>, vector<1x128xf32>
    %13 = arith.addf %11, %12 : vector<1x128xf32>
    %cst_13 = arith.constant 0.000000e+00 : f32
    %14 = vector.broadcast %cst_13 : f32 to vector<1x128xf32>
    %15 = arith.subf %14, %13 : vector<1x128xf32>
    %16 = math.exp %15 : vector<1x128xf32>
    %cst_14 = arith.constant 1.000000e+00 : f32
    %17 = vector.broadcast %cst_14 : f32 to vector<1x128xf32>
    %18 = arith.addf %17, %16 : vector<1x128xf32>
    %cst_15 = arith.constant 1.000000e+00 : f32
    %19 = vector.broadcast %cst_15 : f32 to vector<1x128xf32>
    %20 = arith.divf %19, %18 : vector<1x128xf32>
    %21 = vector.broadcast %20 : vector<1x128xf32> to vector<32x128xf32>
    %22 = arith.mulf %1, %21 : vector<32x128xf32>
    %c0_16 = arith.constant 0 : index
    %c0_17 = arith.constant 0 : index
    %23 = vector.load %arg6[%c0_16, %c0_17] : memref<128x16xf32, #tpu.memory_space<vmem>>, vector<128x16xf32>
    %cst_18 = arith.constant dense<0.000000e+00> : vector<32x16xf32>
    %24 = tpu.matmul %22, %23, %cst_18 {dimension_numbers = #tpu.dot_dimension_numbers<[1], [0], [0], [1], [0, 0, 1, 1], [], []>} : vector<32x128xf32>, vector<128x16xf32>, vector<32x16xf32> -> vector<32x16xf32>
    %c0_19 = arith.constant 0 : index
    %c0_20 = arith.constant 0 : index
    %25 = vector.load %arg7[%c0_19, %c0_20] : memref<1x16xf32, #tpu.memory_space<vmem>>, vector<1x16xf32>
    %26 = vector.broadcast %25 : vector<1x16xf32> to vector<32x16xf32>
    %27 = arith.addf %24, %26 : vector<32x16xf32>
    %cst_21 = arith.constant 0.000000e+00 : f32
    %28 = vector.broadcast %cst_21 : f32 to vector<32x16xf32>
    %29 = arith.maximumf %27, %28 : vector<32x16xf32>
    %c0_22 = arith.constant 0 : index
    %c0_23 = arith.constant 0 : index
    %30 = vector.load %arg8[%c0_22, %c0_23] : memref<16x128xf32, #tpu.memory_space<vmem>>, vector<16x128xf32>
    %cst_24 = arith.constant dense<0.000000e+00> : vector<32x128xf32>
    %31 = tpu.matmul %29, %30, %cst_24 {dimension_numbers = #tpu.dot_dimension_numbers<[1], [0], [0], [1], [0, 0, 1, 1], [], []>} : vector<32x16xf32>, vector<16x128xf32>, vector<32x128xf32> -> vector<32x128xf32>
    %c0_25 = arith.constant 0 : index
    %c0_26 = arith.constant 0 : index
    %32 = vector.load %arg9[%c0_25, %c0_26] : memref<1x128xf32, #tpu.memory_space<vmem>>, vector<1x128xf32>
    %33 = vector.broadcast %32 : vector<1x128xf32> to vector<32x128xf32>
    %34 = arith.addf %31, %33 : vector<32x128xf32>
    %cst_27 = arith.constant 0.000000e+00 : f32
    %35 = vector.broadcast %cst_27 : f32 to vector<32x128xf32>
    %36 = arith.subf %35, %34 : vector<32x128xf32>
    %37 = math.exp %36 : vector<32x128xf32>
    %cst_28 = arith.constant 1.000000e+00 : f32
    %38 = vector.broadcast %cst_28 : f32 to vector<32x128xf32>
    %39 = arith.addf %38, %37 : vector<32x128xf32>
    %cst_29 = arith.constant 1.000000e+00 : f32
    %40 = vector.broadcast %cst_29 : f32 to vector<32x128xf32>
    %41 = arith.divf %40, %39 : vector<32x128xf32>
    %42 = arith.mulf %22, %41 : vector<32x128xf32>
    %c0_30 = arith.constant 0 : index
    %c0_31 = arith.constant 0 : index
    %c0_32 = arith.constant 0 : index
    %43 = vector.load %arg10[%c0_30, %c0_31, %c0_32] : memref<1x32x128xf32, #tpu.memory_space<vmem>>, vector<1x32x128xf32>
    %44 = vector.shape_cast %43 : vector<1x32x128xf32> to vector<32x128xf32>
    %45 = vector.shape_cast %42 : vector<32x128xf32> to vector<1x32x128xf32>
    tpu.vector_store %arg10[%c0_30, %c0_31, %c0_32], %45 {strides = array<i32>} : memref<1x32x128xf32, #tpu.memory_space<vmem>>, vector<1x32x128xf32>,
    return
  }
  func.func @transform_0(%arg0: i32) -> (i32, i32, i32) {
    %c0_i32 = arith.constant 0 : i32
    %c0_i32_0 = arith.constant 0 : i32
    %c0_i32_1 = arith.constant 0 : i32
    return %arg0, %c0_i32, %c0_i32_0 : i32, i32, i32
  }
  func.func @transform_1(%arg0: i32) -> (i32, i32) {
    %c0_i32 = arith.constant 0 : i32
    %c0_i32_0 = arith.constant 0 : i32
    %c0_i32_1 = arith.constant 0 : i32
    return %c0_i32, %c0_i32_0 : i32, i32
  }
  func.func @transform_2(%arg0: i32) -> (i32, i32) {
    %c0_i32 = arith.constant 0 : i32
    %c0_i32_0 = arith.constant 0 : i32
    %c0_i32_1 = arith.constant 0 : i32
    return %c0_i32, %c0_i32_0 : i32, i32
  }
  func.func @transform_3(%arg0: i32) -> (i32, i32) {
    %c0_i32 = arith.constant 0 : i32
    %c0_i32_0 = arith.constant 0 : i32
    %c0_i32_1 = arith.constant 0 : i32
    return %c0_i32, %c0_i32_0 : i32, i32
  }
  func.func @transform_4(%arg0: i32) -> (i32, i32) {
    %c0_i32 = arith.constant 0 : i32
    %c0_i32_0 = arith.constant 0 : i32
    %c0_i32_1 = arith.constant 0 : i32
    return %c0_i32, %c0_i32_0 : i32, i32
  }
  func.func @transform_5(%arg0: i32) -> (i32, i32) {
    %c0_i32 = arith.constant 0 : i32
    %c0_i32_0 = arith.constant 0 : i32
    %c0_i32_1 = arith.constant 0 : i32
    return %c0_i32, %c0_i32_0 : i32, i32
  }
  func.func @transform_6(%arg0: i32) -> (i32, i32) {
    %c0_i32 = arith.constant 0 : i32
    %c0_i32_0 = arith.constant 0 : i32
    %c0_i32_1 = arith.constant 0 : i32
    return %c0_i32, %c0_i32_0 : i32, i32
  }
  func.func @transform_7(%arg0: i32) -> (i32, i32) {
    %c0_i32 = arith.constant 0 : i32
    %c0_i32_0 = arith.constant 0 : i32
    %c0_i32_1 = arith.constant 0 : i32
    return %c0_i32, %c0_i32_0 : i32, i32
  }
  func.func @transform_8(%arg0: i32) -> (i32, i32) {
    %c0_i32 = arith.constant 0 : i32
    %c0_i32_0 = arith.constant 0 : i32
    %c0_i32_1 = arith.constant 0 : i32
    return %c0_i32, %c0_i32_0 : i32, i32
  }
  func.func @transform_9(%arg0: i32) -> (i32, i32, i32) {
    %c0_i32 = arith.constant 0 : i32
    %c0_i32_0 = arith.constant 0 : i32
    %c0_i32_1 = arith.constant 0 : i32
    return %arg0, %c0_i32, %c0_i32_0 : i32, i32, i32
  }
}

</mosaic_0001>

<llo_original>
// kernel: tpu_custom_call.1
$region0: #{tpu_custom_call.1}
  #allocation0 [shape = 'u32[]', space=smem, size = 0x4, offset = 0x4, fixed_abs, tag = 'smem constant byte address 0x4 - core index']
  #allocation1 [shape = 'u32[144,128]{1,0:T(1,128)}', space=vmem, size = 0x12000, scoped, tag = 'internal scratch']
  %s0 = inlined_call_operand.vmem [shape: f32[2,32,128], index: 0, kind: input, shape index: {}]
  %s1 = inlined_call_operand.vmem [shape: f32[128,2], index: 1, kind: input, shape index: {}]
  %s2 = inlined_call_operand.vmem [shape: f32[1,2], index: 2, kind: input, shape index: {}]
  %s3 = inlined_call_operand.vmem [shape: f32[2,128], index: 3, kind: input, shape index: {}]
  %s4 = inlined_call_operand.vmem [shape: f32[1,128], index: 4, kind: input, shape index: {}]
  %s5 = inlined_call_operand.vmem [shape: f32[128,16], index: 5, kind: input, shape index: {}]
  %s6 = inlined_call_operand.vmem [shape: f32[1,16], index: 6, kind: input, shape index: {}]
  %s7 = inlined_call_operand.vmem [shape: f32[16,128], index: 7, kind: input, shape index: {}]
  %s8 = inlined_call_operand.vmem [shape: f32[1,128], index: 8, kind: input, shape index: {}]
  %s9 = inlined_call_operand.hbm [shape: f32[2,32,128], index: 9, kind: output, shape index: {}]
  %s10 = sld [smem:[#allocation0]]
  $region69: #{tpu_custom_call.1} parent=0
    _
  %s12 = ssub.s32 1, %s10
  %s13 = scalar_select 0, %s12, %s10
  $region1: #{tpu_custom_call.1} parent=0
    #allocation2 [shape = 'u8[32768]{0}', space=vmem, size = 0x8000, scoped, tag = 'output window, operand 0']
    #allocation3 [shape = 's32[2]{0}', space=sflag, size = 0x8, scoped, tag = 'scoped memory for tpu_custom_call.1']
    %14 = vsyncpa [#allocation3], 0
    %s15 = scalar_lea.sflag [#allocation3], 1
    %16 = vsyncpa %s15, 0
    loop: start=0, step=1, limit=4
    $region2: #{tpu_custom_call.1} parent=1 // loop_pre_header
      _
    $region3: #{tpu_custom_call.1} parent=1 // loop_header
      %s18 = sphi 0, %s22
      %p19 = scmp.ge.s32.totalorder %s18, 4
      %s28 = sphi 0, %s30
      %s31 = sphi 0, %s28
      %s32 = sphi 0, %s31
      %s48 = sphi 0, %s32
      %s52 = sphi 0, %s52
      %s54 = sphi 0, %s52
      %s55 = sphi 0, %s54
      %s69 = sphi 0, %s55
      %s73 = sphi 0, %s73
      %s75 = sphi 0, %s73
      %s76 = sphi 0, %s75
      %s90 = sphi 0, %s76
      %s94 = sphi 0, %s94
      %s96 = sphi 0, %s94
      %s97 = sphi 0, %s96
      %s111 = sphi 0, %s97
      %s115 = sphi 0, %s115
      %s117 = sphi 0, %s115
      %s118 = sphi 0, %s117
      %s132 = sphi 0, %s118
      %s136 = sphi 0, %s136
      %s138 = sphi 0, %s136
      %s139 = sphi 0, %s138
      %s153 = sphi 0, %s139
      %s157 = sphi 0, %s157
      %s159 = sphi 0, %s157
      %s160 = sphi 0, %s159
      %s174 = sphi 0, %s160
      %s178 = sphi 0, %s178
      %s180 = sphi 0, %s178
      %s181 = sphi 0, %s180
      %s195 = sphi 0, %s181
      %s199 = sphi 0, %s199
      %s201 = sphi 0, %s199
      %s202 = sphi 0, %s201
      %s216 = sphi 0, %s202
      %s222 = sphi 0, %s224
      %s225 = sphi 0, %s222
      %s226 = sphi 0, %s225
      %s242 = sphi 0, %s226
    $region4: #{tpu_custom_call.1} parent=1 // loop_header_branch
      %21 = sbr.rel (%p19) target = $region8
    $region5: #{tpu_custom_call.1} parent=1 // loop_body
      %s23 = ssub.s32 %s18, 1
      %s24 = ssub.s32 %s18, 2
      %s25 = sadd.s32 %s18, 1
      %s26 = ssub.s32 %s18, %s25
      %p27 = scmp.eq.s32.totalorder %s26, 0
      %s29 = sadd.s32 %s28, 1
      %s30 = scalar_select %p27, %s28, %s29
      %p33 = pneg %p27
      %p34 = scmp.eq.s32.totalorder %s18, 1
      %p35 = por %p33, %p34
      %p36 = scmp.ne.s32.totalorder %s28, %s31
      %p37 = scmp.eq.s32.totalorder %s18, 0
      %p38 = por %p36, %p37
      %p39 = scmp.ne.s32.totalorder %s28, %s31
      %p40 = scmp.eq.s32.totalorder %s23, 1
      %p41 = por %p39, %p40
      %p42 = scmp.ne.s32.totalorder %s31, %s32
      %p43 = scmp.eq.s32.totalorder %s23, 0
      %p44 = por %p42, %p43
      %p45 = scmp.ne.s32.totalorder %s31, %s32
      %p46 = scmp.eq.s32.totalorder %s24, 1
      %p47 = por %p45, %p46
      %p49 = scmp.ne.s32.totalorder %s32, %s48
      %p50 = scmp.eq.s32.totalorder %s24, 0
      %p51 = por %p49, %p50
      %s53 = sadd.s32 %s52, 1
      %p56 = scmp.eq.s32.totalorder %s18, 1
      %p57 = scmp.ne.s32.totalorder %s52, %s54
      %p58 = scmp.eq.s32.totalorder %s18, 0
      %p59 = por %p57, %p58
      %p60 = scmp.ne.s32.totalorder %s52, %s54
      %p61 = scmp.eq.s32.totalorder %s23, 1
      %p62 = por %p60, %p61
      %p63 = scmp.ne.s32.totalorder %s54, %s55
      %p64 = scmp.eq.s32.totalorder %s23, 0
      %p65 = por %p63, %p64
      %p66 = scmp.ne.s32.totalorder %s54, %s55
      %p67 = scmp.eq.s32.totalorder %s24, 1
      %p68 = por %p66, %p67
      %p70 = scmp.ne.s32.totalorder %s55, %s69
      %p71 = scmp.eq.s32.totalorder %s24, 0
      %p72 = por %p70, %p71
      %s74 = sadd.s32 %s73, 1
      %p77 = scmp.eq.s32.totalorder %s18, 1
      %p78 = scmp.ne.s32.totalorder %s73, %s75
      %p79 = scmp.eq.s32.totalorder %s18, 0
      %p80 = por %p78, %p79
      %p81 = scmp.ne.s32.totalorder %s73, %s75
      %p82 = scmp.eq.s32.totalorder %s23, 1
      %p83 = por %p81, %p82
      %p84 = scmp.ne.s32.totalorder %s75, %s76
      %p85 = scmp.eq.s32.totalorder %s23, 0
      %p86 = por %p84, %p85
      %p87 = scmp.ne.s32.totalorder %s75, %s76
      %p88 = scmp.eq.s32.totalorder %s24, 1
      %p89 = por %p87, %p88
      %p91 = scmp.ne.s32.totalorder %s76, %s90
      %p92 = scmp.eq.s32.totalorder %s24, 0
      %p93 = por %p91, %p92
      %s95 = sadd.s32 %s94, 1
      %p98 = scmp.eq.s32.totalorder %s18, 1
      %p99 = scmp.ne.s32.totalorder %s94, %s96
      %p100 = scmp.eq.s32.totalorder %s18, 0
      %p101 = por %p99, %p100
      %p102 = scmp.ne.s32.totalorder %s94, %s96
      %p103 = scmp.eq.s32.totalorder %s23, 1
      %p104 = por %p102, %p103
      %p105 = scmp.ne.s32.totalorder %s96, %s97
      %p106 = scmp.eq.s32.totalorder %s23, 0
      %p107 = por %p105, %p106
      %p108 = scmp.ne.s32.totalorder %s96, %s97
      %p109 = scmp.eq.s32.totalorder %s24, 1
      %p110 = por %p108, %p109
      %p112 = scmp.ne.s32.totalorder %s97, %s111
      %p113 = scmp.eq.s32.totalorder %s24, 0
      %p114 = por %p112, %p113
      %s116 = sadd.s32 %s115, 1
      %p119 = scmp.eq.s32.totalorder %s18, 1
      %p120 = scmp.ne.s32.totalorder %s115, %s117
      %p121 = scmp.eq.s32.totalorder %s18, 0
      %p122 = por %p120, %p121
      %p123 = scmp.ne.s32.totalorder %s115, %s117
      %p124 = scmp.eq.s32.totalorder %s23, 1
      %p125 = por %p123, %p124
      %p126 = scmp.ne.s32.totalorder %s117, %s118
      %p127 = scmp.eq.s32.totalorder %s23, 0
      %p128 = por %p126, %p127
      %p129 = scmp.ne.s32.totalorder %s117, %s118
      %p130 = scmp.eq.s32.totalorder %s24, 1
      %p131 = por %p129, %p130
      %p133 = scmp.ne.s32.totalorder %s118, %s132
      %p134 = scmp.eq.s32.totalorder %s24, 0
      %p135 = por %p133, %p134
      %s137 = sadd.s32 %s136, 1
      %p140 = scmp.eq.s32.totalorder %s18, 1
      %p141 = scmp.ne.s32.totalorder %s136, %s138
      %p142 = scmp.eq.s32.totalorder %s18, 0
      %p143 = por %p141, %p142
      %p144 = scmp.ne.s32.totalorder %s136, %s138
      %p145 = scmp.eq.s32.totalorder %s23, 1
      %p146 = por %p144, %p145
      %p147 = scmp.ne.s32.totalorder %s138, %s139
      %p148 = scmp.eq.s32.totalorder %s23, 0
      %p149 = por %p147, %p148
      %p150 = scmp.ne.s32.totalorder %s138, %s139
      %p151 = scmp.eq.s32.totalorder %s24, 1
      %p152 = por %p150, %p151
      %p154 = scmp.ne.s32.totalorder %s139, %s153
      %p155 = scmp.eq.s32.totalorder %s24, 0
      %p156 = por %p154, %p155
      %s158 = sadd.s32 %s157, 1
      %p161 = scmp.eq.s32.totalorder %s18, 1
      %p162 = scmp.ne.s32.totalorder %s157, %s159
      %p163 = scmp.eq.s32.totalorder %s18, 0
      %p164 = por %p162, %p163
      %p165 = scmp.ne.s32.totalorder %s157, %s159
      %p166 = scmp.eq.s32.totalorder %s23, 1
      %p167 = por %p165, %p166
      %p168 = scmp.ne.s32.totalorder %s159, %s160
      %p169 = scmp.eq.s32.totalorder %s23, 0
      %p170 = por %p168, %p169
      %p171 = scmp.ne.s32.totalorder %s159, %s160
      %p172 = scmp.eq.s32.totalorder %s24, 1
      %p173 = por %p171, %p172
      %p175 = scmp.ne.s32.totalorder %s160, %s174
      %p176 = scmp.eq.s32.totalorder %s24, 0
      %p177 = por %p175, %p176
      %s179 = sadd.s32 %s178, 1
      %p182 = scmp.eq.s32.totalorder %s18, 1
      %p183 = scmp.ne.s32.totalorder %s178, %s180
      %p184 = scmp.eq.s32.totalorder %s18, 0
      %p185 = por %p183, %p184
      %p186 = scmp.ne.s32.totalorder %s178, %s180
      %p187 = scmp.eq.s32.totalorder %s23, 1
      %p188 = por %p186, %p187
      %p189 = scmp.ne.s32.totalorder %s180, %s181
      %p190 = scmp.eq.s32.totalorder %s23, 0
      %p191 = por %p189, %p190
      %p192 = scmp.ne.s32.totalorder %s180, %s181
      %p193 = scmp.eq.s32.totalorder %s24, 1
      %p194 = por %p192, %p193
      %p196 = scmp.ne.s32.totalorder %s181, %s195
      %p197 = scmp.eq.s32.totalorder %s24, 0
      %p198 = por %p196, %p197
      %s200 = sadd.s32 %s199, 1
      %p203 = scmp.eq.s32.totalorder %s18, 1
      %p204 = scmp.ne.s32.totalorder %s199, %s201
      %p205 = scmp.eq.s32.totalorder %s18, 0
      %p206 = por %p204, %p205
      %p207 = scmp.ne.s32.totalorder %s199, %s201
      %p208 = scmp.eq.s32.totalorder %s23, 1
      %p209 = por %p207, %p208
      %p210 = scmp.ne.s32.totalorder %s201, %s202
      %p211 = scmp.eq.s32.totalorder %s23, 0
      %p212 = por %p210, %p211
      %p213 = scmp.ne.s32.totalorder %s201, %s202
      %p214 = scmp.eq.s32.totalorder %s24, 1
      %p215 = por %p213, %p214
      %p217 = scmp.ne.s32.totalorder %s202, %s216
      %p218 = scmp.eq.s32.totalorder %s24, 0
      %p219 = por %p217, %p218
      %s220 = ssub.s32 %s18, %s25
      %p221 = scmp.eq.s32.totalorder %s220, 0
      %s223 = sadd.s32 %s222, 1
      %s224 = scalar_select %p221, %s222, %s223
      %p227 = pneg %p221
      %p228 = scmp.eq.s32.totalorder %s18, 1
      %p229 = por %p227, %p228
      %p230 = scmp.ne.s32.totalorder %s222, %s225
      %p231 = scmp.eq.s32.totalorder %s18, 0
      %p232 = por %p230, %p231
      %p233 = scmp.ne.s32.totalorder %s222, %s225
      %p234 = scmp.eq.s32.totalorder %s23, 1
      %p235 = por %p233, %p234
      %p236 = scmp.ne.s32.totalorder %s225, %s226
      %p237 = scmp.eq.s32.totalorder %s23, 0
      %p238 = por %p236, %p237
      %p239 = scmp.ne.s32.totalorder %s225, %s226
      %p240 = scmp.eq.s32.totalorder %s24, 1
      %p241 = por %p239, %p240
      %p243 = scmp.ne.s32.totalorder %s226, %s242
      %p244 = scmp.eq.s32.totalorder %s24, 0
      %p245 = por %p243, %p244
      %p246 = scmp.le.s32.totalorder 1, %s18
      %p247 = scmp.lt.s32.totalorder %s18, 3
      %p248 = pnand %p246, %p247
      %p249 = pneg %p248
      // Predicated region
      $region9: #{tpu_custom_call.1} parent=5 // pred_check
        _
      $region10: #{tpu_custom_call.1} parent=5 // pred_check_branch
        %251 = sbr.rel (%p248) target = $region12
      $region11: #{tpu_custom_call.1} parent=5 // pred_region
        %s252 = ssub.s32 %s18, 1
        // Predicated region
        $region13: #{tpu_custom_call.1} parent=11 // pred_check
          %p253 = pneg %p65
        $region14: #{tpu_custom_call.1} parent=11 // pred_check_branch
          %255 = sbr.rel (%p253) target = $region16
        $region15: #{tpu_custom_call.1} parent=11 // pred_region
          _
        $region16: #{tpu_custom_call.1} parent=11 // pred_fallthru
          _
        // Predicated region
        $region17: #{tpu_custom_call.1} parent=11 // pred_check
          %p256 = pneg %p86
        $region18: #{tpu_custom_call.1} parent=11 // pred_check_branch
          %258 = sbr.rel (%p256) target = $region20
        $region19: #{tpu_custom_call.1} parent=11 // pred_region
          _
        $region20: #{tpu_custom_call.1} parent=11 // pred_fallthru
          _
        // Predicated region
        $region21: #{tpu_custom_call.1} parent=11 // pred_check
          %p259 = pneg %p107
        $region22: #{tpu_custom_call.1} parent=11 // pred_check_branch
          %261 = sbr.rel (%p259) target = $region24
        $region23: #{tpu_custom_call.1} parent=11 // pred_region
          _
        $region24: #{tpu_custom_call.1} parent=11 // pred_fallthru
          _
        // Predicated region
        $region25: #{tpu_custom_call.1} parent=11 // pred_check
          %p262 = pneg %p128
        $region26: #{tpu_custom_call.1} parent=11 // pred_check_branch
          %264 = sbr.rel (%p262) target = $region28
        $region27: #{tpu_custom_call.1} parent=11 // pred_region
          _
        $region28: #{tpu_custom_call.1} parent=11 // pred_fallthru
          _
        // Predicated region
        $region29: #{tpu_custom_call.1} parent=11 // pred_check
          %p265 = pneg %p149
        $region30: #{tpu_custom_call.1} parent=11 // pred_check_branch
          %267 = sbr.rel (%p265) target = $region32
        $region31: #{tpu_custom_call.1} parent=11 // pred_region
          _
        $region32: #{tpu_custom_call.1} parent=11 // pred_fallthru
          _
        // Predicated region
        $region33: #{tpu_custom_call.1} parent=11 // pred_check
          %p268 = pneg %p170
        $region34: #{tpu_custom_call.1} parent=11 // pred_check_branch
          %270 = sbr.rel (%p268) target = $region36
        $region35: #{tpu_custom_call.1} parent=11 // pred_region
          _
        $region36: #{tpu_custom_call.1} parent=11 // pred_fallthru
          _
        // Predicated region
        $region37: #{tpu_custom_call.1} parent=11 // pred_check
          %p271 = pneg %p191
        $region38: #{tpu_custom_call.1} parent=11 // pred_check_branch
          %273 = sbr.rel (%p271) target = $region40
        $region39: #{tpu_custom_call.1} parent=11 // pred_region
          _
        $region40: #{tpu_custom_call.1} parent=11 // pred_fallthru
          _
        // Predicated region
        $region41: #{tpu_custom_call.1} parent=11 // pred_check
          %p274 = pneg %p212
        $region42: #{tpu_custom_call.1} parent=11 // pred_check_branch
          %276 = sbr.rel (%p274) target = $region44
        $region43: #{tpu_custom_call.1} parent=11 // pred_region
          _
        $region44: #{tpu_custom_call.1} parent=11 // pred_fallthru
          _
      $region12: #{tpu_custom_call.1} parent=5 // pred_fallthru
        _
      %p277 = scmp.lt.s32.totalorder %s18, 2
      // Predicated region
      $region45: #{tpu_custom_call.1} parent=5 // pred_check
        %p278 = pneg %p277
      $region46: #{tpu_custom_call.1} parent=5 // pred_check_branch
        %280 = sbr.rel (%p278) target = $region48
      $region47: #{tpu_custom_call.1} parent=5 // pred_region
        // Predicated region
        $region49: #{tpu_custom_call.1} parent=47 // pred_check
          %p281 = pneg %p38
        $region50: #{tpu_custom_call.1} parent=47 // pred_check_branch
          %283 = sbr.rel (%p281) target = $region52
        $region51: #{tpu_custom_call.1} parent=47 // pred_region
          %p284 = scmp.lt.s32.totalorder %s18, 1
          %s285 = scalar_select %p284, %s18, 1
          %s286 = smul.addr %s285, 4
          %s287 = smul.addr %s286, 8
          %s288 = scalar_lea.vmem %s0, %s287
        $region52: #{tpu_custom_call.1} parent=47 // pred_fallthru
          _
      $region48: #{tpu_custom_call.1} parent=5 // pred_fallthru
        _
      %p289 = scmp.le.s32.totalorder 1, %s18
      %p290 = scmp.lt.s32.totalorder %s18, 3
      %p291 = pnand %p289, %p290
      %p292 = pneg %p291
      // Predicated region
      $region53: #{tpu_custom_call.1} parent=5 // pred_check
        _
      $region54: #{tpu_custom_call.1} parent=5 // pred_check_branch
        %294 = sbr.rel (%p291) target = $region56
      $region55: #{tpu_custom_call.1} parent=5 // pred_region
        %s295 = ssub.s32 %s18, 1
        %p296 = scmp.lt.s32.totalorder %s23, 1
        %s297 = scalar_select %p296, %s23, 1
        %s298 = smul.addr %s297, 4
        %s299 = smul.addr %s298, 8
        %s300 = scalar_lea.vmem %s0, %s299
        %p301 = pneg %p44
        %p302 = pneg %p41
        %p303 = pneg %p65
        %p304 = pneg %p62
        %p305 = pneg %p86
        %p306 = pneg %p83
        %p307 = pneg %p107
        %p308 = pneg %p104
        %p309 = pneg %p128
        %p310 = pneg %p125
        %p311 = pneg %p149
        %p312 = pneg %p146
        %p313 = pneg %p170
        %p314 = pneg %p167
        %p315 = pneg %p191
        %p316 = pneg %p188
        %p317 = pneg %p212
        %p318 = pneg %p209
        %p319 = pneg %p238
        %p320 = pneg %p235
        %s321 = sand.u32 %s225, 1
        %s322 = scalar_lea.sflag [#allocation3], %s321
        %s323 = sand.u32 %s225, 1
        %s324 = smul.addr %s323, 32
        %s325 = scalar_lea.vmem [#allocation2], %s324
        %p326 = scmp.lt.s32.totalorder %s23, 1
        %s327 = scalar_select %p326, %s23, 1
        %s328 = smul.addr %s327, 4
        %s329 = smul.addr %s328, 8
        %s330 = scalar_lea.vmem %s0, %s329
        %v331 = vld [vmem:[%s330] sm:$0xff]
        %v332 = vld [vmem:[%s330 + $0x8] sm:$0xff]
        %v333 = vld [vmem:[%s330 + $0x10] sm:$0xff]
        %v334 = vld [vmem:[%s330 + $0x18] sm:$0xff]
        %v335 = vadd.f32 %v331, %v332
        %v336 = vadd.f32 %v335, %v333
        %v337 = vadd.f32 %v336, %v334
        %v338 = vrot.slane %v337, 4
        %v339 = vadd.f32 %v337, %v338
        %v340 = vrot.slane %v339, 2
        %v341 = vadd.f32 %v339, %v340
        %v342 = vrot.slane %v341, 1
        %v343 = vadd.f32 %v341, %v342
        %v344 = vld [vmem:[%s1] sm:$0xff]
        %v345 = vld [vmem:[%s1 + $0x8] sm:$0xff]
        %v346 = vld [vmem:[%s1 + $0x10] sm:$0xff]
        %v347 = vld [vmem:[%s1 + $0x18] sm:$0xff]
        %v348 = vld [vmem:[%s1 + $0x20] sm:$0xff]
        %v349 = vld [vmem:[%s1 + $0x28] sm:$0xff]
        %v350 = vld [vmem:[%s1 + $0x30] sm:$0xff]
        %v351 = vld [vmem:[%s1 + $0x38] sm:$0xff]
        %v352 = vld [vmem:[%s1 + $0x40] sm:$0xff]
        %v353 = vld [vmem:[%s1 + $0x48] sm:$0xff]
        %v354 = vld [vmem:[%s1 + $0x50] sm:$0xff]
        %v355 = vld [vmem:[%s1 + $0x58] sm:$0xff]
        %v356 = vld [vmem:[%s1 + $0x60] sm:$0xff]
        %v357 = vld [vmem:[%s1 + $0x68] sm:$0xff]
        %v358 = vld [vmem:[%s1 + $0x70] sm:$0xff]
        %v359 = vld [vmem:[%s1 + $0x78] sm:$0xff]
        %v360 = vld [vmem:[%s2] sm:$0x1]
        %361 = vmatprep.subr.mxu0 0.0
        %362 = vmatpush1.msra.mxu0 %v344
        %363 = vmatprep.subr.mxu0 0.0
        %364 = vmatpush1.msra.mxu0 %v345
        %365 = vmatprep.subr.mxu0 0.0
        %366 = vmatpush1.msra.mxu0 %v346
        %367 = vmatprep.subr.mxu0 0.0
        %368 = vmatpush1.msra.mxu0 %v347
        %369 = vmatprep.subr.mxu0 0.0
        %370 = vmatpush1.msra.mxu0 %v348
        %371 = vmatprep.subr.mxu0 0.0
        %372 = vmatpush1.msra.mxu0 %v349
        %373 = vmatprep.subr.mxu0 0.0
        %374 = vmatpush1.msra.mxu0 %v350
        %375 = vmatprep.subr.mxu0 0.0
        %376 = vmatpush1.msra.mxu0 %v351
        %377 = vmatprep.subr.mxu0 0.0
        %378 = vmatpush1.msra.mxu0 %v352
        %379 = vmatprep.subr.mxu0 0.0
        %380 = vmatpush1.msra.mxu0 %v353
        %381 = vmatprep.subr.mxu0 0.0
        %382 = vmatpush1.msra.mxu0 %v354
        %383 = vmatprep.subr.mxu0 0.0
        %384 = vmatpush1.msra.mxu0 %v355
        %385 = vmatprep.subr.mxu0 0.0
        %386 = vmatpush1.msra.mxu0 %v356
        %387 = vmatprep.subr.mxu0 0.0
        %388 = vmatpush1.msra.mxu0 %v357
        %389 = vmatprep.subr.mxu0 0.0
        %390 = vmatpush1.msra.mxu0 %v358
        %391 = vmatprep.subr.mxu0 0.0
        %392 = vmatpush1.msra.mxu0 %v359
        %393 = vmatprep.subr.mxu0 0.0
        %394 = vmatpush1.msra.mxu0 0.0
        %395 = vmatprep.subr.mxu0 0.0
        %396 = vmatpush1.msra.mxu0 0.0
        %397 = vmatprep.subr.mxu0 0.0
        %398 = vmatpush1.msra.mxu0 0.0
        %399 = vmatprep.subr.mxu0 0.0
        %400 = vmatpush1.msra.mxu0 0.0
        %401 = vmatprep.subr.mxu0 0.0
        %402 = vmatpush1.msra.mxu0 0.0
        %403 = vmatprep.subr.mxu0 0.0
        %404 = vmatpush1.msra.mxu0 0.0
        %405 = vmatprep.subr.mxu0 0.0
        %406 = vmatpush1.msra.mxu0 0.0
        %407 = vmatprep.subr.mxu0 0.0
        %408 = vmatpush1.msra.mxu0 0.0
        %409 = vmatprep.subr.mxu0 0.0
        %410 = vmatpush1.msra.mxu0 0.0
        %411 = vmatprep.subr.mxu0 0.0
        %412 = vmatpush1.msra.mxu0 0.0
        %413 = vmatprep.subr.mxu0 0.0
        %414 = vmatpush1.msra.mxu0 0.0
        %415 = vmatprep.subr.mxu0 0.0
        %416 = vmatpush1.msra.mxu0 0.0
        %417 = vmatprep.subr.mxu0 0.0
        %418 = vmatpush1.msra.mxu0 0.0
        %419 = vmatprep.subr.mxu0 0.0
        %420 = vmatpush1.msra.mxu0 0.0
        %421 = vmatprep.subr.mxu0 0.0
        %422 = vmatpush1.msra.mxu0 0.0
        %423 = vmatprep.subr.mxu0 0.0
        %424 = vmatpush1.msra.mxu0 0.0
        %425 = vmatprep.mubr.f32.mxu0 0.0
        %426 = vmatmul.mubr.f32.gmra.mrb[0].mxu0 %v343
        %v427 = vpop.f32.mrb[0].mxu0
        %v428 = vadd.f32 %v360, %v427
        %v429 = vpop.f32.mrb[0].mxu0
        %430 = vdwg.mxu0
        %v431 = vmax.f32 %v428, 0.0
        %v432 = vld [vmem:[%s3] sm:$0x3]
        %v433 = vld [vmem:[%s4] sm:$0x1]
        %vm434 = vcmask 15360
        %v436 = vsel %vm434, %v431, 0
        %vm438 = vcmask 1041408
        %v440 = vsel %vm438, %v432, 0
        %442 = vmatprep.subr.mxu0 0.0
        %443 = vmatpush1.msra.mxu0 %v440
        %444 = vmatprep.subr.mxu0 0.0
        %445 = vmatpush1.msra.mxu0 0.0
        %446 = vmatprep.subr.mxu0 0.0
        %447 = vmatpush1.msra.mxu0 0.0
        %448 = vmatprep.subr.mxu0 0.0
        %449 = vmatpush1.msra.mxu0 0.0
        %450 = vmatprep.subr.mxu0 0.0
        %451 = vmatpush1.msra.mxu0 0.0
        %452 = vmatprep.subr.mxu0 0.0
        %453 = vmatpush1.msra.mxu0 0.0
        %454 = vmatprep.subr.mxu0 0.0
        %455 = vmatpush1.msra.mxu0 0.0
        %456 = vmatprep.subr.mxu0 0.0
        %457 = vmatpush1.msra.mxu0 0.0
        %458 = vmatprep.subr.mxu0 0.0
        %459 = vmatpush1.msra.mxu0 0.0
        %460 = vmatprep.subr.mxu0 0.0
        %461 = vmatpush1.msra.mxu0 0.0
        %462 = vmatprep.subr.mxu0 0.0
        %463 = vmatpush1.msra.mxu0 0.0
        %464 = vmatprep.subr.mxu0 0.0
        %465 = vmatpush1.msra.mxu0 0.0
        %466 = vmatprep.subr.mxu0 0.0
        %467 = vmatpush1.msra.mxu0 0.0
        %468 = vmatprep.subr.mxu0 0.0
        %469 = vmatpush1.msra.mxu0 0.0
        %470 = vmatprep.subr.mxu0 0.0
        %471 = vmatpush1.msra.mxu0 0.0
        %472 = vmatprep.subr.mxu0 0.0
        %473 = vmatpush1.msra.mxu0 0.0
        %474 = vmatprep.subr.mxu0 0.0
        %475 = vmatpush1.msra.mxu0 0.0
        %476 = vmatprep.subr.mxu0 0.0
        %477 = vmatpush1.msra.mxu0 0.0
        %478 = vmatprep.subr.mxu0 0.0
        %479 = vmatpush1.msra.mxu0 0.0
        %480 = vmatprep.subr.mxu0 0.0
        %481 = vmatpush1.msra.mxu0 0.0
        %482 = vmatprep.subr.mxu0 0.0
        %483 = vmatpush1.msra.mxu0 0.0
        %484 = vmatprep.subr.mxu0 0.0
        %485 = vmatpush1.msra.mxu0 0.0
        %486 = vmatprep.subr.mxu0 0.0
        %487 = vmatpush1.msra.mxu0 0.0
        %488 = vmatprep.subr.mxu0 0.0
        %489 = vmatpush1.msra.mxu0 0.0
        %490 = vmatprep.subr.mxu0 0.0
        %491 = vmatpush1.msra.mxu0 0.0
        %492 = vmatprep.subr.mxu0 0.0
        %493 = vmatpush1.msra.mxu0 0.0
        %494 = vmatprep.subr.mxu0 0.0
        %495 = vmatpush1.msra.mxu0 0.0
        %496 = vmatprep.subr.mxu0 0.0
        %497 = vmatpush1.msra.mxu0 0.0
        %498 = vmatprep.subr.mxu0 0.0
        %499 = vmatpush1.msra.mxu0 0.0
        %500 = vmatprep.subr.mxu0 0.0
        %501 = vmatpush1.msra.mxu0 0.0
        %502 = vmatprep.subr.mxu0 0.0
        %503 = vmatpush1.msra.mxu0 0.0
        %504 = vmatprep.subr.mxu0 0.0
        %505 = vmatpush1.msra.mxu0 0.0
        %506 = vmatprep.mubr.f32.mxu0 0.0
        %507 = vmatmul.mubr.f32.gmra.mrb[0].mxu0 %v436
        %v508 = vpop.f32.mrb[0].mxu0
        %v509 = vadd.f32 %v433, %v508
        %v510 = vpop.f32.mrb[0].mxu0
        %511 = vdwg.mxu0
        %v512 = vsub.f32 0.0, %v509
        %v513 = vmul.f32 %v512, 1.442695
        %v514 = vpow.pop %v513
        %v515 = vadd.f32 %v514, 1.0
        %v516 = vrcp.pop %v515
        %v517 = vmul.f32 1.0, %v516
        %v518 = vlaneseq
        %v519 = vshrl.u32 %v518, 7
        %v520 = vsub.s32 0, %v519
        %v521 = vrot.slane %v517, %v520
        %v522 = vmul.f32 %v331, %v521
        %v523 = vmul.f32 %v332, %v521
        %v524 = vmul.f32 %v333, %v521
        %v525 = vmul.f32 %v334, %v521
        %v526 = vld [vmem:[%s5] sm:$0xff]
        %v527 = vld [vmem:[%s5 + $0x8] sm:$0xff]
        %v528 = vld [vmem:[%s5 + $0x10] sm:$0xff]
        %v529 = vld [vmem:[%s5 + $0x18] sm:$0xff]
        %v530 = vld [vmem:[%s5 + $0x20] sm:$0xff]
        %v531 = vld [vmem:[%s5 + $0x28] sm:$0xff]
        %v532 = vld [vmem:[%s5 + $0x30] sm:$0xff]
        %v533 = vld [vmem:[%s5 + $0x38] sm:$0xff]
        %v534 = vld [vmem:[%s5 + $0x40] sm:$0xff]
        %v535 = vld [vmem:[%s5 + $0x48] sm:$0xff]
        %v536 = vld [vmem:[%s5 + $0x50] sm:$0xff]
        %v537 = vld [vmem:[%s5 + $0x58] sm:$0xff]
        %v538 = vld [vmem:[%s5 + $0x60] sm:$0xff]
        %v539 = vld [vmem:[%s5 + $0x68] sm:$0xff]
        %v540 = vld [vmem:[%s5 + $0x70] sm:$0xff]
        %v541 = vld [vmem:[%s5 + $0x78] sm:$0xff]
        %v542 = vld [vmem:[%s6] sm:$0x1]
        %v544 = vlaneseq
        %v545 = vshrl.u32 %v544, 7
        %v546 = vsub.s32 0, %v545
        %v547 = vrot.slane %v542, %v546
        %549 = vmatprep.subr.mxu0 0.0
        %550 = vmatpush1.msra.mxu0 %v526
        %551 = vmatprep.subr.mxu0 0.0
        %552 = vmatpush1.msra.mxu0 %v527
        %553 = vmatprep.subr.mxu0 0.0
        %554 = vmatpush1.msra.mxu0 %v528
        %555 = vmatprep.subr.mxu0 0.0
        %556 = vmatpush1.msra.mxu0 %v529
        %557 = vmatprep.subr.mxu0 0.0
        %558 = vmatpush1.msra.mxu0 %v530
        %559 = vmatprep.subr.mxu0 0.0
        %560 = vmatpush1.msra.mxu0 %v531
        %561 = vmatprep.subr.mxu0 0.0
        %562 = vmatpush1.msra.mxu0 %v532
        %563 = vmatprep.subr.mxu0 0.0
        %564 = vmatpush1.msra.mxu0 %v533
        %565 = vmatprep.subr.mxu0 0.0
        %566 = vmatpush1.msra.mxu0 %v534
        %567 = vmatprep.subr.mxu0 0.0
        %568 = vmatpush1.msra.mxu0 %v535
        %569 = vmatprep.subr.mxu0 0.0
        %570 = vmatpush1.msra.mxu0 %v536
        %571 = vmatprep.subr.mxu0 0.0
        %572 = vmatpush1.msra.mxu0 %v537
        %573 = vmatprep.subr.mxu0 0.0
        %574 = vmatpush1.msra.mxu0 %v538
        %575 = vmatprep.subr.mxu0 0.0
        %576 = vmatpush1.msra.mxu0 %v539
        %577 = vmatprep.subr.mxu0 0.0
        %578 = vmatpush1.msra.mxu0 %v540
        %579 = vmatprep.subr.mxu0 0.0
        %580 = vmatpush1.msra.mxu0 %v541
        %581 = vmatprep.subr.mxu0 0.0
        %582 = vmatpush1.msra.mxu0 0.0
        %583 = vmatprep.subr.mxu0 0.0
        %584 = vmatpush1.msra.mxu0 0.0
        %585 = vmatprep.subr.mxu0 0.0
        %586 = vmatpush1.msra.mxu0 0.0
        %587 = vmatprep.subr.mxu0 0.0
        %588 = vmatpush1.msra.mxu0 0.0
        %589 = vmatprep.subr.mxu0 0.0
        %590 = vmatpush1.msra.mxu0 0.0
        %591 = vmatprep.subr.mxu0 0.0
        %592 = vmatpush1.msra.mxu0 0.0
        %593 = vmatprep.subr.mxu0 0.0
        %594 = vmatpush1.msra.mxu0 0.0
        %595 = vmatprep.subr.mxu0 0.0
        %596 = vmatpush1.msra.mxu0 0.0
        %597 = vmatprep.subr.mxu0 0.0
        %598 = vmatpush1.msra.mxu0 0.0
        %599 = vmatprep.subr.mxu0 0.0
        %600 = vmatpush1.msra.mxu0 0.0
        %601 = vmatprep.subr.mxu0 0.0
        %602 = vmatpush1.msra.mxu0 0.0
        %603 = vmatprep.subr.mxu0 0.0
        %604 = vmatpush1.msra.mxu0 0.0
        %605 = vmatprep.subr.mxu0 0.0
        %606 = vmatpush1.msra.mxu0 0.0
        %607 = vmatprep.subr.mxu0 0.0
        %608 = vmatpush1.msra.mxu0 0.0
        %609 = vmatprep.subr.mxu0 0.0
        %610 = vmatpush1.msra.mxu0 0.0
        %611 = vmatprep.subr.mxu0 0.0
        %612 = vmatpush1.msra.mxu0 0.0
        %613 = vmatprep.mubr.f32.mxu0 0.0
        %614 = vmatmul.mubr.f32.gmra.mrb[0].mxu0 %v522
        %v615 = vpop.f32.mrb[0].mxu0
        %v616 = vadd.f32 %v547, %v615
        %v617 = vpop.f32.mrb[0].mxu0
        %618 = vmatprep.mubr.f32.mxu0 0.0
        %619 = vmatmul.mubr.f32.gmra.mrb[0].mxu0 %v523
        %v620 = vpop.f32.mrb[0].mxu0
        %v621 = vadd.f32 %v547, %v620
        %v622 = vpop.f32.mrb[0].mxu0
        %623 = vmatprep.mubr.f32.mxu0 0.0
        %624 = vmatmul.mubr.f32.gmra.mrb[0].mxu0 %v524
        %v625 = vpop.f32.mrb[0].mxu0
        %v626 = vadd.f32 %v547, %v625
        %v627 = vpop.f32.mrb[0].mxu0
        %628 = vmatprep.mubr.f32.mxu0 0.0
        %629 = vmatmul.mubr.f32.gmra.mrb[0].mxu0 %v525
        %v630 = vpop.f32.mrb[0].mxu0
        %v631 = vadd.f32 %v547, %v630
        %v632 = vpop.f32.mrb[0].mxu0
        %633 = vdwg.mxu0
        %v634 = vmax.f32 %v616, 0.0
        %v635 = vmax.f32 %v621, 0.0
        %v636 = vmax.f32 %v626, 0.0
        %v637 = vmax.f32 %v631, 0.0
        %v638 = vld [vmem:[%s7] sm:$0xff]
        %v639 = vld [vmem:[%s7 + $0x8] sm:$0xff]
        %v640 = vld [vmem:[%s8] sm:$0x1]
        %v642 = vlaneseq
        %v643 = vshrl.u32 %v642, 7
        %v644 = vsub.s32 0, %v643
        %v645 = vrot.slane %v640, %v644
        %vm647 = vcmask 130048
        %v649 = vsel %vm647, %v634, 0
        %v652 = vsel %vm647, %v635, 0
        %v655 = vsel %vm647, %v636, 0
        %v658 = vsel %vm647, %v637, 0
        %660 = vmatprep.subr.mxu0 0.0
        %661 = vmatpush1.msra.mxu0 %v638
        %662 = vmatprep.subr.mxu0 0.0
        %663 = vmatpush1.msra.mxu0 %v639
        %664 = vmatprep.subr.mxu0 0.0
        %665 = vmatpush1.msra.mxu0 0.0
        %666 = vmatprep.subr.mxu0 0.0
        %667 = vmatpush1.msra.mxu0 0.0
        %668 = vmatprep.subr.mxu0 0.0
        %669 = vmatpush1.msra.mxu0 0.0
        %670 = vmatprep.subr.mxu0 0.0
        %671 = vmatpush1.msra.mxu0 0.0
        %672 = vmatprep.subr.mxu0 0.0
        %673 = vmatpush1.msra.mxu0 0.0
        %674 = vmatprep.subr.mxu0 0.0
        %675 = vmatpush1.msra.mxu0 0.0
        %676 = vmatprep.subr.mxu0 0.0
        %677 = vmatpush1.msra.mxu0 0.0
        %678 = vmatprep.subr.mxu0 0.0
        %679 = vmatpush1.msra.mxu0 0.0
        %680 = vmatprep.subr.mxu0 0.0
        %681 = vmatpush1.msra.mxu0 0.0
        %682 = vmatprep.subr.mxu0 0.0
        %683 = vmatpush1.msra.mxu0 0.0
        %684 = vmatprep.subr.mxu0 0.0
        %685 = vmatpush1.msra.mxu0 0.0
        %686 = vmatprep.subr.mxu0 0.0
        %687 = vmatpush1.msra.mxu0 0.0
        %688 = vmatprep.subr.mxu0 0.0
        %689 = vmatpush1.msra.mxu0 0.0
        %690 = vmatprep.subr.mxu0 0.0
        %691 = vmatpush1.msra.mxu0 0.0
        %692 = vmatprep.subr.mxu0 0.0
        %693 = vmatpush1.msra.mxu0 0.0
        %694 = vmatprep.subr.mxu0 0.0
        %695 = vmatpush1.msra.mxu0 0.0
        %696 = vmatprep.subr.mxu0 0.0
        %697 = vmatpush1.msra.mxu0 0.0
        %698 = vmatprep.subr.mxu0 0.0
        %699 = vmatpush1.msra.mxu0 0.0
        %700 = vmatprep.subr.mxu0 0.0
        %701 = vmatpush1.msra.mxu0 0.0
        %702 = vmatprep.subr.mxu0 0.0
        %703 = vmatpush1.msra.mxu0 0.0
        %704 = vmatprep.subr.mxu0 0.0
        %705 = vmatpush1.msra.mxu0 0.0
        %706 = vmatprep.subr.mxu0 0.0
        %707 = vmatpush1.msra.mxu0 0.0
        %708 = vmatprep.subr.mxu0 0.0
        %709 = vmatpush1.msra.mxu0 0.0
        %710 = vmatprep.subr.mxu0 0.0
        %711 = vmatpush1.msra.mxu0 0.0
        %712 = vmatprep.subr.mxu0 0.0
        %713 = vmatpush1.msra.mxu0 0.0
        %714 = vmatprep.subr.mxu0 0.0
        %715 = vmatpush1.msra.mxu0 0.0
        %716 = vmatprep.subr.mxu0 0.0
        %717 = vmatpush1.msra.mxu0 0.0
        %718 = vmatprep.subr.mxu0 0.0
        %719 = vmatpush1.msra.mxu0 0.0
        %720 = vmatprep.subr.mxu0 0.0
        %721 = vmatpush1.msra.mxu0 0.0
        %722 = vmatprep.subr.mxu0 0.0
        %723 = vmatpush1.msra.mxu0 0.0
        %724 = vmatprep.mubr.f32.mxu0 0.0
        %725 = vmatmul.mubr.f32.gmra.mrb[0].mxu0 %v649
        %v726 = vpop.f32.mrb[0].mxu0
        %v727 = vadd.f32 %v645, %v726
        %v728 = vpop.f32.mrb[0].mxu0
        %729 = vmatprep.mubr.f32.mxu0 0.0
        %730 = vmatmul.mubr.f32.gmra.mrb[0].mxu0 %v652
        %v731 = vpop.f32.mrb[0].mxu0
        %v732 = vadd.f32 %v645, %v731
        %v733 = vpop.f32.mrb[0].mxu0
        %734 = vmatprep.mubr.f32.mxu0 0.0
        %735 = vmatmul.mubr.f32.gmra.mrb[0].mxu0 %v655
        %v736 = vpop.f32.mrb[0].mxu0
        %v737 = vadd.f32 %v645, %v736
        %v738 = vpop.f32.mrb[0].mxu0
        %739 = vmatprep.mubr.f32.mxu0 0.0
        %740 = vmatmul.mubr.f32.gmra.mrb[0].mxu0 %v658
        %v741 = vpop.f32.mrb[0].mxu0
        %v742 = vadd.f32 %v645, %v741
        %v743 = vpop.f32.mrb[0].mxu0
        %744 = vdwg.mxu0
        %v745 = vsub.f32 0.0, %v727
        %v746 = vsub.f32 0.0, %v732
        %v747 = vsub.f32 0.0, %v737
        %v748 = vsub.f32 0.0, %v742
        %v749 = vmul.f32 %v745, 1.442695
        %v750 = vpow.pop %v749
        %v751 = vmul.f32 %v746, 1.442695
        %v752 = vpow.pop %v751
        %v753 = vmul.f32 %v747, 1.442695
        %v754 = vpow.pop %v753
        %v755 = vmul.f32 %v748, 1.442695
        %v756 = vpow.pop %v755
        %v757 = vadd.f32 %v750, 1.0
        %v758 = vadd.f32 %v752, 1.0
        %v759 = vadd.f32 %v754, 1.0
        %v760 = vadd.f32 %v756, 1.0
        %v761 = vrcp.pop %v757
        %v762 = vmul.f32 1.0, %v761
        %v763 = vrcp.pop %v758
        %v764 = vmul.f32 1.0, %v763
        %v765 = vrcp.pop %v759
        %v766 = vmul.f32 1.0, %v765
        %v767 = vrcp.pop %v760
        %v768 = vmul.f32 1.0, %v767
        %v769 = vmul.f32 %v522, %v762
        %v770 = vmul.f32 %v523, %v764
        %v771 = vmul.f32 %v524, %v766
        %v772 = vmul.f32 %v525, %v768
        %773 = vst [vmem:[%s325] sm:$0xff] %v769
        %774 = vst [vmem:[%s325 + $0x8] sm:$0xff] %v770
        %775 = vst [vmem:[%s325 + $0x10] sm:$0xff] %v771
        %776 = vst [vmem:[%s325 + $0x18] sm:$0xff] %v772
        %s777 = sand.u32 %s225, 1
        %s778 = scalar_lea.sflag [#allocation3], %s777
        %s779 = sand.u32 %s225, 1
        %s780 = smul.addr %s779, 32
        %s781 = scalar_lea.vmem [#allocation2], %s780
        // Predicated region
        $region57: #{tpu_custom_call.1} parent=55 // pred_check
          %p782 = pneg %p235
        $region58: #{tpu_custom_call.1} parent=55 // pred_check_branch
          %784 = sbr.rel (%p782) target = $region60
        $region59: #{tpu_custom_call.1} parent=55 // pred_region
          %s786 = ssub.s32 512, 512
          %787 = vsyncadd %s778, %s786
          %s788 = smul.addr %s23, 4
          %s789 = smul.addr %s788, 128
          %s790 = scalar_lea.hbm %s9, %s789
          %s791 = sshll.u32 %s781, 4
          %s792 = int_to_ptr.vmem [resolvable:$true] %s791
          %797 = dma.vmem_to_hbm [thread:$0]  %s792, 512, %s790, %s778, 128, 128, 8
        $region60: #{tpu_custom_call.1} parent=55 // pred_fallthru
          _
      $region56: #{tpu_custom_call.1} parent=5 // pred_fallthru
        _
      %p798 = scmp.le.s32.totalorder 2, %s18
      // Predicated region
      $region61: #{tpu_custom_call.1} parent=5 // pred_check
        %p799 = pneg %p798
      $region62: #{tpu_custom_call.1} parent=5 // pred_check_branch
        %801 = sbr.rel (%p799) target = $region64
      $region63: #{tpu_custom_call.1} parent=5 // pred_region
        %s802 = ssub.s32 %s18, 2
        // Predicated region
        $region65: #{tpu_custom_call.1} parent=63 // pred_check
          %p803 = pneg %p241
        $region66: #{tpu_custom_call.1} parent=63 // pred_check_branch
          %805 = sbr.rel (%p803) target = $region68
        $region67: #{tpu_custom_call.1} parent=63 // pred_region
          %s806 = sand.u32 %s226, 1
          %s807 = scalar_lea.sflag [#allocation3], %s806
          %s808 = sand.u32 %s226, 1
          %s809 = smul.addr %s808, 32
          %s810 = scalar_lea.vmem [#allocation2], %s809
          %811 = dma.done %s807, 512
        $region68: #{tpu_custom_call.1} parent=63 // pred_fallthru
          _
      $region64: #{tpu_custom_call.1} parent=5 // pred_fallthru
        _
    $region6: #{tpu_custom_call.1} parent=1 // loop_footer
      %s22 = sadd.s32 1, %s18
    $region7: #{tpu_custom_call.1} parent=1 // loop_footer_branch
      %17 = sbr.rel target = $region3
    $region8: #{tpu_custom_call.1} parent=1 // loop_exit
      _
    %812 = vsyncpa [#allocation3], 1
    %s813 = scalar_lea.sflag [#allocation3], 1
    %814 = vsyncpa %s813, 1

</llo_original>
